<compile_context>
chip_gen: v7x
topology: tpu7x:2x2x1
jax: 0.10.0
libtpu: 0.0.40
codegen_flags: <defaults>
</compile_context>

<pallas_src>
import functools

import jax
import jax.numpy as jnp
from jax.experimental import pallas as pl
from jax.experimental.pallas import tpu as pltpu


# ---------------------------------------------------------------------------
# Parameter glue: spectral norm (matches SpectralNorm.compute_weight, bound=True)
# ---------------------------------------------------------------------------
def spectral_norm_weight(weight, u, bound=True):
    wm = weight.reshape(weight.shape[0], -1)
    v = wm.T @ u
    v = v / jnp.linalg.norm(v)
    u2 = wm @ v
    u2 = u2 / jnp.linalg.norm(u2)
    sigma = u2 @ wm @ v
    if bound:
        return weight / (sigma + 1e-6) * jnp.minimum(sigma, 1.0)
    return weight / sigma


# ---------------------------------------------------------------------------
# Pallas kernel: TB graphs per grid step
# ---------------------------------------------------------------------------
def graphconv_kernel(h_ref, w_ref, adj_ref, o_ref, m_ref, *, tb, node, out_ch,
                     num_edge_type, compute_dtype):
    # h_ref:   (TB*node, in_ch)       compute_dtype
    # w_ref:   (in_ch, E*out_ch)      compute_dtype, resident (constant index_map)
    # adj_ref: (TB*node, E*node)      compute_dtype; column index = e*node + j
    # o_ref:   (TB*node, out_ch)      output dtype (f32)
    # m_ref:   (TB, E*node, out_ch)   VMEM scratch, compute_dtype
    E = num_edge_type

    # Stage 1: fused linear over all edge types — ONE lane-dense (.., 128) MXU
    # push, f32 accumulation.  m_all[(b*node+j), e*out_ch+o] == m[b, e, j, o].
    m_all = jnp.dot(h_ref[...], w_ref[...], preferred_element_type=jnp.float32)
    m_all = m_all.astype(compute_dtype)            # single narrow-cast (v5e note)

    # Re-group per-edge column blocks into K-concatenated row blocks so the
    # E-reduction of stage 2 happens inside the MXU accumulator.  node == 8
    # matches the sublane tile, so these reshapes/slice-stores are tile-aligned
    # (no lane<->sublane relayout).
    for e in range(E):
        m_e = m_all[:, e * out_ch:(e + 1) * out_ch]            # (TB*node, out_ch)
        m_ref[:, e * node:(e + 1) * node, :] = m_e.reshape(tb, node, out_ch)

    # Stage 2: one K = E*node matmul per graph, batched over the TB graphs of
    # this step; the sum over edge types is done by the MXU f32 accumulator.
    adj_b = adj_ref[...].reshape(tb, node, E * node)           # (TB, node, E*node)
    hr = jnp.einsum("bik,bko->bio", adj_b, m_ref[...],
                    preferred_element_type=jnp.float32)        # (TB, node, out_ch)

    o_ref[...] = hr.reshape(tb * node, out_ch).astype(o_ref.dtype)


def graph_conv(adj, h, weight_sn, out_ch, num_edge_type, *,
               compute_dtype=jnp.bfloat16, batch_block=None):
    """adj: (mb, E, node, node), h: (mb, node, in_ch), weight_sn: (out_ch*E, in_ch)."""
    mb, node, in_ch = h.shape
    E = num_edge_type
    out_dtype = h.dtype

    # TB graphs per grid step: aim for TB*node ~= 128 MXU rows, clamp to mb.
    if batch_block is None:
        batch_block = max(1, 128 // node)
    tb = max(1, min(mb, batch_block))
    mb_pad = pl.cdiv(mb, tb) * tb
    if mb_pad != mb:                       # zero-pad batch; padded rows are sliced off
        h = jnp.pad(h, ((0, mb_pad - mb), (0, 0), (0, 0)))
        adj = jnp.pad(adj, ((0, mb_pad - mb), (0, 0), (0, 0), (0, 0)))

    # W_cat[k, e*out_ch + o] == weight_sn[o*E + e, k]
    # (matches the PyTorch reshape(out_ch, E) / permute semantics).
    w_cat = (weight_sn.reshape(out_ch, E, in_ch)
             .transpose(2, 1, 0)
             .reshape(in_ch, E * out_ch))

    # Wrapper-side layouts (cast to the narrow compute dtype so the DMAs stream
    # fewer bytes; adj dominates traffic at realistic node counts):
    #   h2  : (mb*node, in_ch)
    #   adj2: (mb*node, E*node) with adj2[b*node+i, e*node+j] = adj[b, e, i, j]
    # TODO(synk): if the real adjacency is {0,1}, stream it as int8 (v5e/v6e) or
    # fp8 (v7x) instead of bf16 to further halve the dominant DMA traffic.
    h2 = h.reshape(mb_pad * node, in_ch).astype(compute_dtype)
    adj2 = (adj.transpose(0, 2, 1, 3)
            .reshape(mb_pad * node, E * node)
            .astype(compute_dtype))
    w_c = w_cat.astype(compute_dtype)

    itm = jnp.dtype(compute_dtype).itemsize
    flops = 2 * mb_pad * (node * in_ch * E * out_ch + E * node * node * out_ch)
    bytes_accessed = (mb_pad * E * node * node * itm           # adj
                      + mb_pad * node * in_ch * itm            # h
                      + in_ch * E * out_ch * itm               # W
                      + mb_pad * node * out_ch * jnp.dtype(out_dtype).itemsize)

    kernel = functools.partial(graphconv_kernel, tb=tb, node=node, out_ch=out_ch,
                               num_edge_type=E, compute_dtype=compute_dtype)

    # Per-step VMEM (double-buffered h/adj/out + resident W + scratch) is a few
    # tens of KiB here — far below every generation's scoped VMEM default.  If
    # node/TB grow, re-derive against v7x's 64 MiB and set vmem_limit_bytes.
    out2 = pl.pallas_call(
        kernel,
        out_shape=jax.ShapeDtypeStruct((mb_pad * node, out_ch), out_dtype),
        grid_spec=pltpu.PrefetchScalarGridSpec(
            num_scalar_prefetch=0,
            grid=(mb_pad // tb,),
            in_specs=[
                pl.BlockSpec((tb * node, in_ch), lambda b: (b, 0)),      # h block
                pl.BlockSpec((in_ch, E * out_ch), lambda b: (0, 0)),     # W, resident
                pl.BlockSpec((tb * node, E * node), lambda b: (b, 0)),   # adj block
            ],
            out_specs=pl.BlockSpec((tb * node, out_ch), lambda b: (b, 0)),
            scratch_shapes=[pltpu.VMEM((tb, E * node, out_ch), compute_dtype)],
        ),
        compiler_params=pltpu.CompilerParams(
            dimension_semantics=("parallel",),   # v7x: the two TCs split the batch blocks
        ),
        cost_estimate=pl.CostEstimate(flops=flops, transcendentals=0,
                                      bytes_accessed=bytes_accessed),
    )(h2, w_c, adj2)

    return out2.reshape(mb_pad, node, out_ch)[:mb]


# ---------------------------------------------------------------------------
# Pure-JAX references
# ---------------------------------------------------------------------------
def graph_conv_ref(adj, h, weight_sn, out_ch, num_edge_type):
    """Exact mirror of the PyTorch forward in f32."""
    mb, node, _ = h.shape
    m = h @ weight_sn.T                                   # (mb, node, out_ch*E)
    m = m.reshape(mb, node, out_ch, num_edge_type)
    m = jnp.transpose(m, (0, 3, 1, 2))                    # (mb, E, node, out_ch)
    hr = jnp.matmul(adj, m)                               # (mb, E, node, out_ch)
    return hr.sum(axis=1)                                 # (mb, node, out_ch)


def graph_conv_ref_mixed(adj, h, weight_sn, out_ch, num_edge_type):
    """Mirrors the kernel's precision path: bf16 operands, f32 accumulation,
    m rounded to bf16 before the adj contraction."""
    f32 = lambda x: x.astype(jnp.float32)
    hb = h.astype(jnp.bfloat16)
    wb = weight_sn.astype(jnp.bfloat16)
    ab = adj.astype(jnp.bfloat16)
    mb_, node, _ = h.shape
    m = f32(hb) @ f32(wb).T
    m = m.astype(jnp.bfloat16)
    m = f32(m).reshape(mb_, node, out_ch, num_edge_type)
    m = jnp.transpose(m, (0, 3, 1, 2))
    hr = jnp.matmul(f32(ab), m)
    return hr.sum(axis=1)


if __name__ == "__main__":
    # Small shapes consistent with the module
    mb, node, in_ch, out_ch, E = 2, 8, 16, 32, 4
    std = 1.0

    key = jax.random.PRNGKey(0)
    k_w, k_u, k_adj, k_h = jax.random.split(key, 4)

    # Deterministic "init": weight ~ N(0, std), u ~ N(0, 1) (as in spectral_norm / apply)
    weight_orig = std * jax.random.normal(k_w, (out_ch * E, in_ch), jnp.float32)
    u = jax.random.normal(k_u, (out_ch * E,), jnp.float32)
    weight_sn = spectral_norm_weight(weight_orig, u, bound=True)

    # Example inputs
    adj = jax.random.uniform(k_adj, (mb, E, node, node), jnp.float32)
    h = jax.random.normal(k_h, (mb, node, in_ch), jnp.float32)

    out = graph_conv(adj, h, weight_sn, out_ch, E)
    out = jax.block_until_ready(out)
    assert out.shape == (mb, node, out_ch)

    # Tight check against a reference that mirrors the kernel's precision path
    # (bf16 operands, f32 accumulation; m rounded to bf16 once).
    ref_mixed = graph_conv_ref_mixed(adj, h, weight_sn, out_ch, E)
    assert jnp.allclose(out, ref_mixed, atol=2e-3, rtol=2e-3), \
        "mismatch vs mixed-precision reference"

    # Loose sanity check against the exact f32 reference (bf16 operand noise only;
    # a structural/layout bug would produce O(1) errors and still be caught).
    ref_f32 = graph_conv_ref(adj, h, weight_sn, out_ch, E)
    assert jnp.allclose(out, ref_f32, atol=2e-1, rtol=1e-1), \
        "mismatch vs f32 reference"

    # TODO(synk): add_self=True branch (extra spectral-norm'd nn.Linear added to hr)
    # is not exercised here since the constructor default is add_self=False.
    print("KERNEL_OK")
</pallas_src>

<mosaic_0001>
module attributes {stable_mosaic.version = 11 : i64} {
  func.func @graphconv_kernel(%arg0: i32, %arg1: memref<16x16xbf16, #tpu.memory_space<vmem>>, %arg2: memref<16x128xbf16, #tpu.memory_space<vmem>>, %arg3: memref<16x32xbf16, #tpu.memory_space<vmem>>, %arg4: memref<16x32xf32, #tpu.memory_space<vmem>>, %arg5: memref<2x32x32xbf16, #tpu.memory_space<vmem>>) attributes {dimension_semantics = [#tpu.dimension_semantics<parallel>], iteration_bounds = array<i64: 1>, scalar_prefetch = 0 : i64, scratch_operands = 1 : i64, tpu.core_type = #tpu.core_type<tc>, window_params = [{transform_indices = @transform_0, window_bounds = array<i64: 16, 16>}, {pipeline_mode = #tpu.pipeline_mode<synchronous>, transform_indices = @transform_1, window_bounds = array<i64: 16, 128>}, {transform_indices = @transform_2, window_bounds = array<i64: 16, 32>}, {transform_indices = @transform_3, window_bounds = array<i64: 16, 32>}]} {
    %c0 = arith.constant 0 : index
    %c0_0 = arith.constant 0 : index
    %0 = vector.load %arg1[%c0, %c0_0] : memref<16x16xbf16, #tpu.memory_space<vmem>>, vector<16x16xbf16>
    %c0_1 = arith.constant 0 : index
    %c0_2 = arith.constant 0 : index
    %1 = vector.load %arg2[%c0_1, %c0_2] : memref<16x128xbf16, #tpu.memory_space<vmem>>, vector<16x128xbf16>
    %cst = arith.constant dense<0.000000e+00> : vector<16x128xf32>
    %2 = tpu.matmul %0, %1, %cst {dimension_numbers = #tpu.dot_dimension_numbers<[1], [0], [0], [1], [0, 0, 1, 1], [], []>} : vector<16x16xbf16>, vector<16x128xbf16>, vector<16x128xf32> -> vector<16x128xf32>
    %3 = arith.truncf %2 : vector<16x128xf32> to vector<16x128xbf16>
    %4 = vector.extract_strided_slice %3 {offsets = [0, 0], sizes = [16, 32], strides = [1, 1]} : vector<16x128xbf16> to vector<16x32xbf16>
    %5 = vector.shape_cast %4 : vector<16x32xbf16> to vector<2x8x32xbf16>
    %c0_3 = arith.constant 0 : index
    %c0_4 = arith.constant 0 : index
    %c0_5 = arith.constant 0 : index
    %6 = vector.load %arg5[%c0_3, %c0_4, %c0_5] : memref<2x32x32xbf16, #tpu.memory_space<vmem>>, vector<2x8x32xbf16>
    tpu.vector_store %arg5[%c0_3, %c0_4, %c0_5], %5 {strides = array<i32>} : memref<2x32x32xbf16, #tpu.memory_space<vmem>>, vector<2x8x32xbf16>,
    %7 = vector.extract_strided_slice %3 {offsets = [0, 32], sizes = [16, 32], strides = [1, 1]} : vector<16x128xbf16> to vector<16x32xbf16>
    %8 = vector.shape_cast %7 : vector<16x32xbf16> to vector<2x8x32xbf16>
    %c0_6 = arith.constant 0 : index
    %c8 = arith.constant 8 : index
    %c0_7 = arith.constant 0 : index
    %9 = vector.load %arg5[%c0_6, %c8, %c0_7] : memref<2x32x32xbf16, #tpu.memory_space<vmem>>, vector<2x8x32xbf16>
    tpu.vector_store %arg5[%c0_6, %c8, %c0_7], %8 {strides = array<i32>} : memref<2x32x32xbf16, #tpu.memory_space<vmem>>, vector<2x8x32xbf16>,
    %10 = vector.extract_strided_slice %3 {offsets = [0, 64], sizes = [16, 32], strides = [1, 1]} : vector<16x128xbf16> to vector<16x32xbf16>
    %11 = vector.shape_cast %10 : vector<16x32xbf16> to vector<2x8x32xbf16>
    %c0_8 = arith.constant 0 : index
    %c16 = arith.constant 16 : index
    %c0_9 = arith.constant 0 : index
    %12 = vector.load %arg5[%c0_8, %c16, %c0_9] : memref<2x32x32xbf16, #tpu.memory_space<vmem>>, vector<2x8x32xbf16>
    tpu.vector_store %arg5[%c0_8, %c16, %c0_9], %11 {strides = array<i32>} : memref<2x32x32xbf16, #tpu.memory_space<vmem>>, vector<2x8x32xbf16>,
    %13 = vector.extract_strided_slice %3 {offsets = [0, 96], sizes = [16, 32], strides = [1, 1]} : vector<16x128xbf16> to vector<16x32xbf16>
    %14 = vector.shape_cast %13 : vector<16x32xbf16> to vector<2x8x32xbf16>
    %c0_10 = arith.constant 0 : index
    %c24 = arith.constant 24 : index
    %c0_11 = arith.constant 0 : index
    %15 = vector.load %arg5[%c0_10, %c24, %c0_11] : memref<2x32x32xbf16, #tpu.memory_space<vmem>>, vector<2x8x32xbf16>
    tpu.vector_store %arg5[%c0_10, %c24, %c0_11], %14 {strides = array<i32>} : memref<2x32x32xbf16, #tpu.memory_space<vmem>>, vector<2x8x32xbf16>,
    %c0_12 = arith.constant 0 : index
    %c0_13 = arith.constant 0 : index
    %16 = vector.load %arg3[%c0_12, %c0_13] : memref<16x32xbf16, #tpu.memory_space<vmem>>, vector<16x32xbf16>
    %17 = vector.shape_cast %16 : vector<16x32xbf16> to vector<2x8x32xbf16>
    %c0_14 = arith.constant 0 : index
    %c0_15 = arith.constant 0 : index
    %c0_16 = arith.constant 0 : index
    %18 = vector.load %arg5[%c0_14, %c0_15, %c0_16] : memref<2x32x32xbf16, #tpu.memory_space<vmem>>, vector<2x32x32xbf16>
    "tpu.trace_start"() <{level = 10 : i32, message = "bik,bko->bio"}> : () -> ()
    %cst_17 = arith.constant dense<0.000000e+00> : vector<2x8x32xf32>
    %19 = tpu.matmul %17, %18, %cst_17 {dimension_numbers = #tpu.dot_dimension_numbers<[2], [1], [1], [2], [0, 0, 0, 1, 1, 2], [0], [0]>} : vector<2x8x32xbf16>, vector<2x32x32xbf16>, vector<2x8x32xf32> -> vector<2x8x32xf32>
    "tpu.trace_stop"() : () -> ()
    %20 = vector.shape_cast %19 : vector<2x8x32xf32> to vector<16x32xf32>
    %c0_18 = arith.constant 0 : index
    %c0_19 = arith.constant 0 : index
    %21 = vector.load %arg4[%c0_18, %c0_19] : memref<16x32xf32, #tpu.memory_space<vmem>>, vector<16x32xf32>
    tpu.vector_store %arg4[%c0_18, %c0_19], %20 {strides = array<i32>} : memref<16x32xf32, #tpu.memory_space<vmem>>, vector<16x32xf32>,
    return
  }
  func.func @transform_0(%arg0: i32) -> (i32, i32) {
    %c0_i32 = arith.constant 0 : i32
    %c0_i32_0 = arith.constant 0 : i32
    return %arg0, %c0_i32 : i32, i32
  }
  func.func @transform_1(%arg0: i32) -> (i32, i32) {
    %c0_i32 = arith.constant 0 : i32
    %c0_i32_0 = arith.constant 0 : i32
    %c0_i32_1 = arith.constant 0 : i32
    return %c0_i32, %c0_i32_0 : i32, i32
  }
  func.func @transform_2(%arg0: i32) -> (i32, i32) {
    %c0_i32 = arith.constant 0 : i32
    %c0_i32_0 = arith.constant 0 : i32
    return %arg0, %c0_i32 : i32, i32
  }
  func.func @transform_3(%arg0: i32) -> (i32, i32) {
    %c0_i32 = arith.constant 0 : i32
    %c0_i32_0 = arith.constant 0 : i32
    return %arg0, %c0_i32 : i32, i32
  }
}

</mosaic_0001>

<llo_original>
// kernel: tpu_custom_call.1
$region0: #{tpu_custom_call.1}
  #allocation0 [shape = 'u32[]', space=smem, size = 0x4, offset = 0x4, fixed_abs, tag = 'smem constant byte address 0x4 - core index']
  #allocation1 [shape = 'u32[144,128]{1,0:T(1,128)}', space=vmem, size = 0x12000, scoped, tag = 'internal scratch']
  #allocation2 [shape = 'bf16[2,32,32]{2,1,0:T(16,128)(2,1)}', space=vmem, size = 0x4000, scoped, tag = 'scratch operand']
  %s0 = inlined_call_operand.hbm [shape: bf16[16,16], index: 0, kind: input, shape index: {}]
  %s1 = inlined_call_operand.hbm [shape: bf16[16,128], index: 1, kind: input, shape index: {}]
  %s2 = inlined_call_operand.hbm [shape: bf16[16,32], index: 2, kind: input, shape index: {}]
  %s3 = inlined_call_operand.hbm [shape: f32[16,32], index: 3, kind: output, shape index: {}]
  %s4 = sld [smem:[#allocation0]]
  $region34: #{tpu_custom_call.1} parent=0
    _
  %s6 = ssub.s32 1, %s4
  %s7 = scalar_select 0, %s6, %s4
  $region1: #{tpu_custom_call.1} parent=0
    #allocation3 [shape = 'u8[4096]{0}', space=vmem, size = 0x1000, scoped, tag = 'input window, operand 0, single buffered']
    #allocation4 [shape = 's32[1]{0}', space=sflag, size = 0x4, scoped, tag = 'scoped memory for tpu_custom_call.1']
    #allocation5 [shape = 's32[1]{0}', space=sflag, size = 0x4, scoped, tag = 'scoped memory for tpu_custom_call.1']
    #allocation6 [shape = 'u8[4096]{0}', space=vmem, size = 0x1000, scoped, tag = 'input window, operand 1, single buffered']
    #allocation7 [shape = 's32[1]{0}', space=sflag, size = 0x4, scoped, tag = 'scoped memory for tpu_custom_call.1']
    #allocation8 [shape = 'u8[4096]{0}', space=vmem, size = 0x1000, scoped, tag = 'input window, operand 2, single buffered']
    #allocation9 [shape = 'u8[8192]{0}', space=vmem, size = 0x2000, scoped, tag = 'output window, operand 0, single buffered']
    %8 = vsyncpa [#allocation4], 0
    %9 = vsyncpa [#allocation7], 0
    %10 = vsyncpa [#allocation5], 0
    // Predicated region
    $region2: #{tpu_custom_call.1} parent=1 // pred_check
      _
    $region3: #{tpu_custom_call.1} parent=1 // pred_check_branch
      %12 = sbr.rel (0) target = $region5
    $region4: #{tpu_custom_call.1} parent=1 // pred_region
      %s14 = ssub.s32 128, 128
      %15 = vsyncadd [#allocation4], %s14
      %s16 = sshll.u32 [#allocation3], 4
      %s17 = int_to_ptr.vmem [resolvable:$true] %s16
      %22 = dma.hbm_to_vmem [thread:$0]  %s0, 128, %s17, [#allocation4], 64, 64, 4
    $region5: #{tpu_custom_call.1} parent=1 // pred_fallthru
      _
    // Predicated region
    $region6: #{tpu_custom_call.1} parent=1 // pred_check
      _
    $region7: #{tpu_custom_call.1} parent=1 // pred_check_branch
      %24 = sbr.rel (0) target = $region9
    $region8: #{tpu_custom_call.1} parent=1 // pred_region
      %s26 = ssub.s32 128, 128
      %27 = vsyncadd [#allocation7], %s26
      %s28 = sshll.u32 [#allocation6], 4
      %s29 = int_to_ptr.vmem [resolvable:$true] %s28
      %34 = dma.hbm_to_vmem [thread:$0]  %s1, 128, %s29, [#allocation7], 64, 64, 4
    $region9: #{tpu_custom_call.1} parent=1 // pred_fallthru
      _
    // Predicated region
    $region10: #{tpu_custom_call.1} parent=1 // pred_check
      _
    $region11: #{tpu_custom_call.1} parent=1 // pred_check_branch
      %36 = sbr.rel (0) target = $region13
    $region12: #{tpu_custom_call.1} parent=1 // pred_region
      %s38 = ssub.s32 128, 128
      %39 = vsyncadd [#allocation7], %s38
      %s40 = sshll.u32 [#allocation8], 4
      %s41 = int_to_ptr.vmem [resolvable:$true] %s40
      %46 = dma.hbm_to_vmem [thread:$0]  %s2, 128, %s41, [#allocation7], 64, 64, 4
    $region13: #{tpu_custom_call.1} parent=1 // pred_fallthru
      _
    // Predicated region
    $region14: #{tpu_custom_call.1} parent=1 // pred_check
      _
    $region15: #{tpu_custom_call.1} parent=1 // pred_check_branch
      %48 = sbr.rel (0) target = $region17
    $region16: #{tpu_custom_call.1} parent=1 // pred_region
      %49 = dma.done [#allocation4], 128
    $region17: #{tpu_custom_call.1} parent=1 // pred_fallthru
      _
    // Predicated region
    $region18: #{tpu_custom_call.1} parent=1 // pred_check
      _
    $region19: #{tpu_custom_call.1} parent=1 // pred_check_branch
      %51 = sbr.rel (0) target = $region21
    $region20: #{tpu_custom_call.1} parent=1 // pred_region
      %52 = dma.done [#allocation7], 128
    $region21: #{tpu_custom_call.1} parent=1 // pred_fallthru
      _
    // Predicated region
    $region22: #{tpu_custom_call.1} parent=1 // pred_check
      _
    $region23: #{tpu_custom_call.1} parent=1 // pred_check_branch
      %54 = sbr.rel (0) target = $region25
    $region24: #{tpu_custom_call.1} parent=1 // pred_region
      %55 = dma.done [#allocation7], 128
    $region25: #{tpu_custom_call.1} parent=1 // pred_fallthru
      _
    %v57 = vld [vmem:[#allocation3] sm:$0xf]
    %v58 = vld [vmem:[#allocation3 + $0x4] sm:$0xf]
    %v59 = vld [vmem:[#allocation6] sm:$0xf]
    %v60 = vld [vmem:[#allocation6 + $0x4] sm:$0xf]
    %v63 = vunpack.c.l.b16 %v57
    %v64 = vunpack.c.l.b16 %v58
    %v65 = vpack.c.b16 %v64, %v63
    %v68 = vunpack.c.l.b16 %v59
    %v69 = vunpack.c.l.b16 %v60
    %v70 = vpack.c.b16 %v69, %v68
    %vm72 = vcmask 130048
    %v74 = vsel %vm72, %v65, 0
    %76 = vmatprep.subr.bf16.mxu0 0
    %77 = vmatpush1.bf16.msra.mxu0 %v70
    %78 = vmatprep.subr.bf16.mxu0 0
    %79 = vmatpush1.bf16.msra.mxu0 0
    %80 = vmatprep.subr.bf16.mxu0 0
    %81 = vmatpush1.bf16.msra.mxu0 0
    %82 = vmatprep.subr.bf16.mxu0 0
    %83 = vmatpush1.bf16.msra.mxu0 0
    %84 = vmatprep.subr.bf16.mxu0 0
    %85 = vmatpush1.bf16.msra.mxu0 0
    %86 = vmatprep.subr.bf16.mxu0 0
    %87 = vmatpush1.bf16.msra.mxu0 0
    %88 = vmatprep.subr.bf16.mxu0 0
    %89 = vmatpush1.bf16.msra.mxu0 0
    %90 = vmatprep.subr.bf16.mxu0 0
    %91 = vmatpush1.bf16.msra.mxu0 0
    %92 = vmatprep.subr.bf16.mxu0 0
    %93 = vmatpush1.bf16.msra.mxu0 0
    %94 = vmatprep.subr.bf16.mxu0 0
    %95 = vmatpush1.bf16.msra.mxu0 0
    %96 = vmatprep.subr.bf16.mxu0 0
    %97 = vmatpush1.bf16.msra.mxu0 0
    %98 = vmatprep.subr.bf16.mxu0 0
    %99 = vmatpush1.bf16.msra.mxu0 0
    %100 = vmatprep.subr.bf16.mxu0 0
    %101 = vmatpush1.bf16.msra.mxu0 0
    %102 = vmatprep.subr.bf16.mxu0 0
    %103 = vmatpush1.bf16.msra.mxu0 0
    %104 = vmatprep.subr.bf16.mxu0 0
    %105 = vmatpush1.bf16.msra.mxu0 0
    %106 = vmatprep.subr.bf16.mxu0 0
    %107 = vmatpush1.bf16.msra.mxu0 0
    %108 = vmatprep.mubr.bf16.mxu0 0
    %109 = vmatmul.mubr.bf16.gmra.mrb[0].mxu0 %v74
    %v110 = vpop.f32.mrb[0].mxu0
    %v111 = vadd.f32 0.0, %v110
    %v112 = vpop.f32.mrb[0].mxu0
    %v113 = vpop.f32.mrb[0].mxu0
    %v114 = vadd.f32 0.0, %v113
    %v115 = vpop.f32.mrb[0].mxu0
    %116 = vdwg.mxu0
    %v117 = vpack.c.bf16 %v114, %v111
    %v119 = vunpack.c.l.b16 %v117
    %v120 = vunpack.c.h.b16 %v117
    %v121 = vpack.c.b16 %v119, %v119
    %v122 = vpack.c.b16 %v120, %v120
    %vm125 = vcmask 257024
    %126 = vst.msk [vmem:[#allocation2] sm:$0xf] %vm125, %v121
    %127 = vst.msk [vmem:[#allocation2 + $0x10] sm:$0xf] %vm125, %v122
    %128 = vrot.lane.b32.xlu0 %v121, 96
    %v129 = vpop.permute.xlu0 %128
    %130 = vrot.lane.b32.xlu0 %v122, 96
    %v131 = vpop.permute.xlu0 %130
    %vm134 = vcmask 261124
    %135 = vst.msk [vmem:[#allocation2] sm:$0xf0] %vm134, %v129
    %136 = vst.msk [vmem:[#allocation2 + $0x10] sm:$0xf0] %vm134, %v131
    %137 = vrot.lane.b32.xlu0 %v121, 64
    %v138 = vpop.permute.xlu0 %137
    %139 = vrot.lane.b32.xlu0 %v122, 64
    %v140 = vpop.permute.xlu0 %139
    %143 = vst.msk [vmem:[#allocation2 + $0x8] sm:$0xf] %vm125, %v138
    %144 = vst.msk [vmem:[#allocation2 + $0x18] sm:$0xf] %vm125, %v140
    %145 = vrot.lane.b32.xlu0 %v121, 32
    %v146 = vpop.permute.xlu0 %145
    %147 = vrot.lane.b32.xlu0 %v122, 32
    %v148 = vpop.permute.xlu0 %147
    %151 = vst.msk [vmem:[#allocation2 + $0x8] sm:$0xf0] %vm134, %v146
    %152 = vst.msk [vmem:[#allocation2 + $0x18] sm:$0xf0] %vm134, %v148
    %v153 = vld [vmem:[#allocation8] sm:$0xf]
    %v154 = vld [vmem:[#allocation8 + $0x4] sm:$0xf]
    %v155 = vld [vmem:[#allocation2] sm:$0xff]
    %v156 = vld [vmem:[#allocation2 + $0x8] sm:$0xff]
    %v157 = vld [vmem:[#allocation2 + $0x10] sm:$0xff]
    %v158 = vld [vmem:[#allocation2 + $0x18] sm:$0xff]
    %vm159 = vcmask 261120
    %v161 = vsel %vm159, %v153, 0
    %163 = vmatprep.subr.bf16.mxu0 0
    %164 = vmatpush1.bf16.msra.mxu0 %v155
    %165 = vmatprep.subr.bf16.mxu0 0
    %166 = vmatpush1.bf16.msra.mxu0 %v156
    %167 = vmatprep.subr.bf16.mxu0 0
    %168 = vmatpush1.bf16.msra.mxu0 0
    %169 = vmatprep.subr.bf16.mxu0 0
    %170 = vmatpush1.bf16.msra.mxu0 0
    %171 = vmatprep.subr.bf16.mxu0 0
    %172 = vmatpush1.bf16.msra.mxu0 0
    %173 = vmatprep.subr.bf16.mxu0 0
    %174 = vmatpush1.bf16.msra.mxu0 0
    %175 = vmatprep.subr.bf16.mxu0 0
    %176 = vmatpush1.bf16.msra.mxu0 0
    %177 = vmatprep.subr.bf16.mxu0 0
    %178 = vmatpush1.bf16.msra.mxu0 0
    %179 = vmatprep.subr.bf16.mxu0 0
    %180 = vmatpush1.bf16.msra.mxu0 0
    %181 = vmatprep.subr.bf16.mxu0 0
    %182 = vmatpush1.bf16.msra.mxu0 0
    %183 = vmatprep.subr.bf16.mxu0 0
    %184 = vmatpush1.bf16.msra.mxu0 0
    %185 = vmatprep.subr.bf16.mxu0 0
    %186 = vmatpush1.bf16.msra.mxu0 0
    %187 = vmatprep.subr.bf16.mxu0 0
    %188 = vmatpush1.bf16.msra.mxu0 0
    %189 = vmatprep.subr.bf16.mxu0 0
    %190 = vmatpush1.bf16.msra.mxu0 0
    %191 = vmatprep.subr.bf16.mxu0 0
    %192 = vmatpush1.bf16.msra.mxu0 0
    %193 = vmatprep.subr.bf16.mxu0 0
    %194 = vmatpush1.bf16.msra.mxu0 0
    %195 = vmatprep.mubr.bf16.mxu0 0
    %196 = vmatmul.mubr.bf16.gmra.mrb[0].mxu0 %v161
    %v197 = vpop.f32.mrb[0].mxu0
    %v198 = vadd.f32 0.0, %v197
    %v199 = vpop.f32.mrb[0].mxu0
    %v200 = vpop.f32.mrb[0].mxu0
    %v201 = vpop.f32.mrb[0].mxu0
    %202 = vdwg.mxu0
    %v204 = vsel %vm159, %v154, 0
    %206 = vmatprep.subr.bf16.mxu0 0
    %207 = vmatpush1.bf16.msra.mxu0 %v157
    %208 = vmatprep.subr.bf16.mxu0 0
    %209 = vmatpush1.bf16.msra.mxu0 %v158
    %210 = vmatprep.subr.bf16.mxu0 0
    %211 = vmatpush1.bf16.msra.mxu0 0
    %212 = vmatprep.subr.bf16.mxu0 0
    %213 = vmatpush1.bf16.msra.mxu0 0
    %214 = vmatprep.subr.bf16.mxu0 0
    %215 = vmatpush1.bf16.msra.mxu0 0
    %216 = vmatprep.subr.bf16.mxu0 0
    %217 = vmatpush1.bf16.msra.mxu0 0
    %218 = vmatprep.subr.bf16.mxu0 0
    %219 = vmatpush1.bf16.msra.mxu0 0
    %220 = vmatprep.subr.bf16.mxu0 0
    %221 = vmatpush1.bf16.msra.mxu0 0
    %222 = vmatprep.subr.bf16.mxu0 0
    %223 = vmatpush1.bf16.msra.mxu0 0
    %224 = vmatprep.subr.bf16.mxu0 0
    %225 = vmatpush1.bf16.msra.mxu0 0
    %226 = vmatprep.subr.bf16.mxu0 0
    %227 = vmatpush1.bf16.msra.mxu0 0
    %228 = vmatprep.subr.bf16.mxu0 0
    %229 = vmatpush1.bf16.msra.mxu0 0
    %230 = vmatprep.subr.bf16.mxu0 0
    %231 = vmatpush1.bf16.msra.mxu0 0
    %232 = vmatprep.subr.bf16.mxu0 0
    %233 = vmatpush1.bf16.msra.mxu0 0
    %234 = vmatprep.subr.bf16.mxu0 0
    %235 = vmatpush1.bf16.msra.mxu0 0
    %236 = vmatprep.subr.bf16.mxu0 0
    %237 = vmatpush1.bf16.msra.mxu0 0
    %238 = vmatprep.mubr.bf16.mxu0 0
    %239 = vmatmul.mubr.bf16.gmra.mrb[0].mxu0 %v204
    %v240 = vpop.f32.mrb[0].mxu0
    %v241 = vadd.f32 0.0, %v240
    %v242 = vpop.f32.mrb[0].mxu0
    %v243 = vpop.f32.mrb[0].mxu0
    %v244 = vpop.f32.mrb[0].mxu0
    %245 = vdwg.mxu0
    %246 = vst.msk [vmem:[#allocation9] sm:$0xff] %vm159, %v198
    %247 = vst.msk [vmem:[#allocation9 + $0x8] sm:$0xff] %vm159, %v241
    // Predicated region
    $region26: #{tpu_custom_call.1} parent=1 // pred_check
      _
    $region27: #{tpu_custom_call.1} parent=1 // pred_check_branch
      %249 = sbr.rel (0) target = $region29
    $region28: #{tpu_custom_call.1} parent=1 // pred_region
      %s251 = ssub.s32 256, 256
      %252 = vsyncadd [#allocation5], %s251
      %s253 = sshll.u32 [#allocation9], 4
      %s254 = int_to_ptr.vmem [resolvable:$true] %s253
      %259 = dma.vmem_to_hbm [thread:$0]  %s254, 256, %s3, [#allocation5], 128, 128, 8
    $region29: #{tpu_custom_call.1} parent=1 // pred_fallthru
      _
    // Predicated region
    $region30: #{tpu_custom_call.1} parent=1 // pred_check
      _
    $region31: #{tpu_custom_call.1} parent=1 // pred_check_branch
      %261 = sbr.rel (0) target = $region33
    $region32: #{tpu_custom_call.1} parent=1 // pred_region
      %262 = dma.done [#allocation5], 256
    $region33: #{tpu_custom_call.1} parent=1 // pred_fallthru
      _
    %263 = vsyncpa [#allocation4], 1
    %264 = vsyncpa [#allocation7], 1
    %265 = vsyncpa [#allocation5], 1

</llo_original>
